<compile_context>
chip_gen: v7x
topology: tpu7x:2x2x1
jax: 0.10.0
libtpu: 0.0.40
codegen_flags: <defaults>
</compile_context>

<pallas_src>
import functools

import jax
import jax.numpy as jnp
import numpy as np
from jax import lax
from jax.experimental import pallas as pl
from jax.experimental.pallas import tpu as pltpu


def _upsample2x_kernel(w_ref, b_ref, xs_ref, out_ref, *, wp):
    # w_ref  : (4*Cout, 9*Cin)          bf16  -- phase-major taps, BN scale folded in
    # b_ref  : (4*Cout, 1)              f32   -- fused BN bias per (phase, cout) row
    # xs_ref : (1, 1, Cin, (TH+3)*wp)   bf16  -- zero-padded, flattened input row-slab
    # out_ref: (1, 1, 4*Cout, TH*wp)    f32   -- row = phase*Cout + co, col = i*wp + j
    #                                            (cols j in [W, wp) are discarded later)
    L = out_ref.shape[-1]
    # Gather the 9 shifted windows directly from the VMEM ref (static lane offsets);
    # they become the K axis of a single MXU matmul.
    xg = jnp.concatenate(
        [xs_ref[0, 0, :, dy * wp + dx: dy * wp + dx + L]
         for dy in range(3) for dx in range(3)],
        axis=0)                                                        # (9*Cin, L) bf16
    y = jnp.dot(w_ref[...], xg, preferred_element_type=jnp.float32)   # (4*Cout, L) f32
    y = y + b_ref[...]                       # BatchNorm (eval); scale already in taps
    out_ref[0, 0] = (y * jax.nn.sigmoid(y)).astype(out_ref.dtype)      # SiLU


def _pick_row_tile(H, Cout, Wp, target_bytes=1 << 20):
    """Largest divisor of H whose per-step output block stays under ~1 MiB."""
    best = 1
    for th in range(1, H + 1):
        if H % th == 0 and 4 * Cout * th * Wp * 4 <= target_bytes:
            best = th
    return best


def upsample2x(x_nchw, w, gamma, beta, running_mean, running_var,
               eps=1e-5, row_tile=None):
    """Forward of Upsample2x (conv_t=True): ConvTranspose2d(4,2,1,bias=False) -> BN(eval) -> SiLU.

    x_nchw: (N, Cin, H, W); w: (Cin, Cout, 4, 4). Returns (N, Cout, 2H, 2W) float32.
    """
    N, Cin, H, W = x_nchw.shape
    Cout = w.shape[1]
    Wp = W + 2                                # padded width (1 left, 1 right)

    TH = row_tile if row_tile is not None else _pick_row_tile(H, Cout, Wp)
    assert H % TH == 0, f"row_tile={TH} must divide H={H}"
    n_t = H // TH
    Ls = (TH + 3) * Wp                        # flat slab length (incl. 3 halo rows)
    L = TH * Wp                               # output columns per slab (per phase)

    f32 = jnp.float32

    # ---- glue: fused BN(eval) affine, tap gather (tiny, weight-sized) ----
    inv_std = lax.rsqrt(running_var.astype(f32) + eps)
    scale = gamma.astype(f32) * inv_std                               # (Cout,)
    bias = beta.astype(f32) - running_mean.astype(f32) * scale        # (Cout,)

    # y[2i+ry, 2j+rx, co] = sum_{sl,tl,ci} x_pad[ci, i+ry+sl, j+rx+tl] * w[ci,co,3-ry-2sl,3-rx-2tl]
    # Pack taps as (phase, cout, window, cin), window = dy*3+dx with (dy,dx) = (ry+sl, rx+tl).
    wt = jnp.zeros((4, Cout, 9, Cin), f32)
    for ry in range(2):
        for rx in range(2):
            for sl in range(2):
                for tl in range(2):
                    tap = w[:, :, 3 - ry - 2 * sl, 3 - rx - 2 * tl].astype(f32)  # (Cin, Cout)
                    wt = wt.at[ry * 2 + rx, :, (ry + sl) * 3 + (rx + tl), :].set(tap.T)
    wt = (wt * scale[None, :, None, None]).reshape(4 * Cout, 9 * Cin).astype(jnp.bfloat16)
    bb = jnp.broadcast_to(bias[None, :], (4, Cout)).reshape(4 * Cout, 1)          # f32

    # ---- glue: pad + halo'd row slabs + flatten (input-sized; bf16) ----
    xp = jnp.pad(x_nchw.astype(jnp.bfloat16), ((0, 0), (0, 0), (1, 2), (1, 1)))   # (N,Cin,H+3,Wp)
    slabs = jnp.stack([xp[:, :, t * TH: t * TH + TH + 3, :] for t in range(n_t)], axis=1)
    xs = slabs.reshape(N, n_t, Cin, Ls)                                           # (N,n_t,Cin,Ls)

    # ---- hot path ----
    out = pl.pallas_call(
        functools.partial(_upsample2x_kernel, wp=Wp),
        out_shape=jax.ShapeDtypeStruct((N, n_t, 4 * Cout, L), f32),
        grid_spec=pltpu.PrefetchScalarGridSpec(
            num_scalar_prefetch=0,
            grid=(N, n_t),
            in_specs=[
                pl.BlockSpec((4 * Cout, 9 * Cin), lambda n, t: (0, 0)),
                pl.BlockSpec((4 * Cout, 1), lambda n, t: (0, 0)),
                pl.BlockSpec((1, 1, Cin, Ls), lambda n, t: (n, t, 0, 0)),
            ],
            out_specs=pl.BlockSpec((1, 1, 4 * Cout, L), lambda n, t: (n, t, 0, 0)),
        ),
        compiler_params=pltpu.CompilerParams(
            dimension_semantics=("parallel", "parallel"),
            vmem_limit_bytes=32 * 1024 * 1024,
        ),
    )(wt, bb, xs)

    # ---- glue: drop garbage columns, interleave the 4 phases back to NCHW ----
    out = out.reshape(N, n_t, 2, 2, Cout, TH, Wp)[..., :W]       # (N,n_t,ry,rx,Cout,TH,W)
    y = jnp.transpose(out, (0, 4, 1, 5, 2, 6, 3))                # (N,Cout,n_t,TH,ry,W,rx)
    return y.reshape(N, Cout, 2 * H, 2 * W)


def _reference(x_nchw, w, gamma, beta, running_mean, running_var, eps=1e-5):
    # ConvTranspose2d(k=4, s=2, p=1, bias=False) via dilated conv with flipped kernel.
    rhs = jnp.transpose(w[:, :, ::-1, ::-1], (1, 0, 2, 3))  # (Cout, Cin, 4, 4)
    up = lax.conv_general_dilated(
        x_nchw, rhs, window_strides=(1, 1), padding=[(2, 2), (2, 2)],
        lhs_dilation=(2, 2), rhs_dilation=(1, 1),
        dimension_numbers=('NCHW', 'OIHW', 'NCHW'))
    inv_std = 1.0 / jnp.sqrt(running_var + eps)
    y = (up - running_mean[None, :, None, None]) * inv_std[None, :, None, None]
    y = y * gamma[None, :, None, None] + beta[None, :, None, None]
    return y * jax.nn.sigmoid(y)


if __name__ == "__main__":
    key = jax.random.PRNGKey(0)
    k_x, k_w, k_g, k_b, k_m, k_v = jax.random.split(key, 6)

    N, Cin, Cout, H, W = 2, 4, 8, 16, 16
    x = jax.random.normal(k_x, (N, Cin, H, W), dtype=jnp.float32)
    # ConvTranspose2d weight shape: (Cin, Cout, 4, 4)
    w = jax.random.normal(k_w, (Cin, Cout, 4, 4), dtype=jnp.float32) * 0.1
    gamma = 1.0 + 0.1 * jax.random.normal(k_g, (Cout,), dtype=jnp.float32)
    beta = 0.1 * jax.random.normal(k_b, (Cout,), dtype=jnp.float32)
    running_mean = 0.1 * jax.random.normal(k_m, (Cout,), dtype=jnp.float32)
    running_var = jnp.abs(1.0 + 0.1 * jax.random.normal(k_v, (Cout,), dtype=jnp.float32))

    y_ref = _reference(x, w, gamma, beta, running_mean, running_var)

    # Exercise the row-tiled path (2 row tiles) ...
    y = jax.block_until_ready(
        upsample2x(x, w, gamma, beta, running_mean, running_var, row_tile=8))
    assert y.shape == (N, Cout, 2 * H, 2 * W), y.shape
    # bf16 matmul inputs -> compare against the f32 reference at a bf16-appropriate tolerance.
    np.testing.assert_allclose(np.asarray(y), np.asarray(y_ref), rtol=2e-2, atol=2e-2)

    # ... and the default (single-tile) path.
    y2 = jax.block_until_ready(
        upsample2x(x, w, gamma, beta, running_mean, running_var))
    np.testing.assert_allclose(np.asarray(y2), np.asarray(y_ref), rtol=2e-2, atol=2e-2)

    print("KERNEL_OK")
</pallas_src>

<mosaic_0001>
module attributes {stable_mosaic.version = 11 : i64} {
  func.func @_upsample2x_kernel(%arg0: i32, %arg1: i32, %arg2: memref<32x36xbf16, #tpu.memory_space<vmem>>, %arg3: memref<32x1xf32, #tpu.memory_space<vmem>>, %arg4: memref<1x1x4x198xbf16, #tpu.memory_space<vmem>>, %arg5: memref<1x1x32x144xf32, #tpu.memory_space<vmem>>) attributes {dimension_semantics = [#tpu.dimension_semantics<parallel>, #tpu.dimension_semantics<parallel>], iteration_bounds = array<i64: 2, 2>, scalar_prefetch = 0 : i64, scratch_operands = 0 : i64, tpu.core_type = #tpu.core_type<tc>, window_params = [{pipeline_mode = #tpu.pipeline_mode<synchronous>, transform_indices = @transform_0, window_bounds = array<i64: 32, 36>}, {pipeline_mode = #tpu.pipeline_mode<synchronous>, transform_indices = @transform_1, window_bounds = array<i64: 32, 1>}, {transform_indices = @transform_2, window_bounds = array<i64: 1, 1, 4, 198>}, {transform_indices = @transform_3, window_bounds = array<i64: 1, 1, 32, 144>}]} {
    %c0 = arith.constant 0 : index
    %c0_0 = arith.constant 0 : index
    %c0_1 = arith.constant 0 : index
    %c0_2 = arith.constant 0 : index
    %0 = vector.load %arg4[%c0, %c0_0, %c0_1, %c0_2] : memref<1x1x4x198xbf16, #tpu.memory_space<vmem>>, vector<1x1x4x144xbf16>
    %1 = vector.shape_cast %0 : vector<1x1x4x144xbf16> to vector<4x144xbf16>
    %c0_3 = arith.constant 0 : index
    %c0_4 = arith.constant 0 : index
    %c0_5 = arith.constant 0 : index
    %c1 = arith.constant 1 : index
    %2 = vector.load %arg4[%c0_3, %c0_4, %c0_5, %c1] : memref<1x1x4x198xbf16, #tpu.memory_space<vmem>>, vector<1x1x4x144xbf16>
    %3 = vector.shape_cast %2 : vector<1x1x4x144xbf16> to vector<4x144xbf16>
    %c0_6 = arith.constant 0 : index
    %c0_7 = arith.constant 0 : index
    %c0_8 = arith.constant 0 : index
    %c2 = arith.constant 2 : index
    %4 = vector.load %arg4[%c0_6, %c0_7, %c0_8, %c2] : memref<1x1x4x198xbf16, #tpu.memory_space<vmem>>, vector<1x1x4x144xbf16>
    %5 = vector.shape_cast %4 : vector<1x1x4x144xbf16> to vector<4x144xbf16>
    %c0_9 = arith.constant 0 : index
    %c0_10 = arith.constant 0 : index
    %c0_11 = arith.constant 0 : index
    %c18 = arith.constant 18 : index
    %6 = vector.load %arg4[%c0_9, %c0_10, %c0_11, %c18] : memref<1x1x4x198xbf16, #tpu.memory_space<vmem>>, vector<1x1x4x144xbf16>
    %7 = vector.shape_cast %6 : vector<1x1x4x144xbf16> to vector<4x144xbf16>
    %c0_12 = arith.constant 0 : index
    %c0_13 = arith.constant 0 : index
    %c0_14 = arith.constant 0 : index
    %c19 = arith.constant 19 : index
    %8 = vector.load %arg4[%c0_12, %c0_13, %c0_14, %c19] : memref<1x1x4x198xbf16, #tpu.memory_space<vmem>>, vector<1x1x4x144xbf16>
    %9 = vector.shape_cast %8 : vector<1x1x4x144xbf16> to vector<4x144xbf16>
    %c0_15 = arith.constant 0 : index
    %c0_16 = arith.constant 0 : index
    %c0_17 = arith.constant 0 : index
    %c20 = arith.constant 20 : index
    %10 = vector.load %arg4[%c0_15, %c0_16, %c0_17, %c20] : memref<1x1x4x198xbf16, #tpu.memory_space<vmem>>, vector<1x1x4x144xbf16>
    %11 = vector.shape_cast %10 : vector<1x1x4x144xbf16> to vector<4x144xbf16>
    %c0_18 = arith.constant 0 : index
    %c0_19 = arith.constant 0 : index
    %c0_20 = arith.constant 0 : index
    %c36 = arith.constant 36 : index
    %12 = vector.load %arg4[%c0_18, %c0_19, %c0_20, %c36] : memref<1x1x4x198xbf16, #tpu.memory_space<vmem>>, vector<1x1x4x144xbf16>
    %13 = vector.shape_cast %12 : vector<1x1x4x144xbf16> to vector<4x144xbf16>
    %c0_21 = arith.constant 0 : index
    %c0_22 = arith.constant 0 : index
    %c0_23 = arith.constant 0 : index
    %c37 = arith.constant 37 : index
    %14 = vector.load %arg4[%c0_21, %c0_22, %c0_23, %c37] : memref<1x1x4x198xbf16, #tpu.memory_space<vmem>>, vector<1x1x4x144xbf16>
    %15 = vector.shape_cast %14 : vector<1x1x4x144xbf16> to vector<4x144xbf16>
    %c0_24 = arith.constant 0 : index
    %c0_25 = arith.constant 0 : index
    %c0_26 = arith.constant 0 : index
    %c38 = arith.constant 38 : index
    %16 = vector.load %arg4[%c0_24, %c0_25, %c0_26, %c38] : memref<1x1x4x198xbf16, #tpu.memory_space<vmem>>, vector<1x1x4x144xbf16>
    %17 = vector.shape_cast %16 : vector<1x1x4x144xbf16> to vector<4x144xbf16>
    %18 = tpu.concatenate %1, %3, %5, %7, %9, %11, %13, %15, %17 in 0 : vector<4x144xbf16>, vector<4x144xbf16>, vector<4x144xbf16>, vector<4x144xbf16>, vector<4x144xbf16>, vector<4x144xbf16>, vector<4x144xbf16>, vector<4x144xbf16>, vector<4x144xbf16> -> vector<36x144xbf16>
    %c0_27 = arith.constant 0 : index
    %c0_28 = arith.constant 0 : index
    %19 = vector.load %arg2[%c0_27, %c0_28] : memref<32x36xbf16, #tpu.memory_space<vmem>>, vector<32x36xbf16>
    %cst = arith.constant dense<0.000000e+00> : vector<32x144xf32>
    %20 = tpu.matmul %19, %18, %cst {dimension_numbers = #tpu.dot_dimension_numbers<[1], [0], [0], [1], [0, 0, 1, 1], [], []>} : vector<32x36xbf16>, vector<36x144xbf16>, vector<32x144xf32> -> vector<32x144xf32>
    %c0_29 = arith.constant 0 : index
    %c0_30 = arith.constant 0 : index
    %21 = vector.load %arg3[%c0_29, %c0_30] : memref<32x1xf32, #tpu.memory_space<vmem>>, vector<32x1xf32>
    %22 = vector.broadcast %21 : vector<32x1xf32> to vector<32x144xf32>
    %23 = arith.addf %20, %22 : vector<32x144xf32>
    %24 = arith.negf %23 : vector<32x144xf32>
    %25 = math.exp %24 : vector<32x144xf32>
    %cst_31 = arith.constant 1.000000e+00 : f32
    %26 = vector.broadcast %cst_31 : f32 to vector<32x144xf32>
    %27 = arith.addf %26, %25 : vector<32x144xf32>
    %28 = arith.divf %26, %27 : vector<32x144xf32>
    %29 = arith.mulf %23, %28 : vector<32x144xf32>
    %c0_32 = arith.constant 0 : index
    %c0_33 = arith.constant 0 : index
    %c0_34 = arith.constant 0 : index
    %c0_35 = arith.constant 0 : index
    %30 = vector.load %arg5[%c0_32, %c0_33, %c0_34, %c0_35] : memref<1x1x32x144xf32, #tpu.memory_space<vmem>>, vector<1x1x32x144xf32>
    %31 = vector.shape_cast %30 : vector<1x1x32x144xf32> to vector<32x144xf32>
    %32 = vector.shape_cast %29 : vector<32x144xf32> to vector<1x1x32x144xf32>
    tpu.vector_store %arg5[%c0_32, %c0_33, %c0_34, %c0_35], %32 {strides = array<i32>} : memref<1x1x32x144xf32, #tpu.memory_space<vmem>>, vector<1x1x32x144xf32>,
    return
  }
  func.func @transform_0(%arg0: i32, %arg1: i32) -> (i32, i32) {
    %c0_i32 = arith.constant 0 : i32
    %c0_i32_0 = arith.constant 0 : i32
    %c0_i32_1 = arith.constant 0 : i32
    return %c0_i32, %c0_i32_0 : i32, i32
  }
  func.func @transform_1(%arg0: i32, %arg1: i32) -> (i32, i32) {
    %c0_i32 = arith.constant 0 : i32
    %c0_i32_0 = arith.constant 0 : i32
    %c0_i32_1 = arith.constant 0 : i32
    return %c0_i32, %c0_i32_0 : i32, i32
  }
  func.func @transform_2(%arg0: i32, %arg1: i32) -> (i32, i32, i32, i32) {
    %c0_i32 = arith.constant 0 : i32
    %c0_i32_0 = arith.constant 0 : i32
    %c0_i32_1 = arith.constant 0 : i32
    return %arg0, %arg1, %c0_i32, %c0_i32_0 : i32, i32, i32, i32
  }
  func.func @transform_3(%arg0: i32, %arg1: i32) -> (i32, i32, i32, i32) {
    %c0_i32 = arith.constant 0 : i32
    %c0_i32_0 = arith.constant 0 : i32
    %c0_i32_1 = arith.constant 0 : i32
    return %arg0, %arg1, %c0_i32, %c0_i32_0 : i32, i32, i32, i32
  }
}

</mosaic_0001>

<llo_original>
// kernel: tpu_custom_call.1
$region0: #{tpu_custom_call.1}
  #allocation0 [shape = 'u32[]', space=smem, size = 0x4, offset = 0x4, fixed_abs, tag = 'smem constant byte address 0x4 - core index']
  #allocation1 [shape = 'u32[144,128]{1,0:T(1,128)}', space=vmem, size = 0x12000, scoped, tag = 'internal scratch']
  %s0 = inlined_call_operand.vmem [shape: bf16[32,36], index: 0, kind: input, shape index: {}]
  %s1 = inlined_call_operand.vmem [shape: f32[32,1], index: 1, kind: input, shape index: {}]
  %s2 = inlined_call_operand.vmem [shape: bf16[2,2,4,198], index: 2, kind: input, shape index: {}]
  %s3 = inlined_call_operand.hbm [shape: f32[2,2,32,144], index: 3, kind: output, shape index: {}]
  %s4 = sld [smem:[#allocation0]]
  $region45: #{tpu_custom_call.1} parent=0
    _
  %s6 = ssub.s32 1, %s4
  %s7 = scalar_select 0, %s6, %s4
  $region1: #{tpu_custom_call.1} parent=0
    #allocation2 [shape = 'u8[65536]{0}', space=vmem, size = 0x10000, scoped, tag = 'output window, operand 0']
    #allocation3 [shape = 's32[2]{0}', space=sflag, size = 0x8, scoped, tag = 'scoped memory for tpu_custom_call.1']
    %8 = vsyncpa [#allocation3], 0
    %s9 = scalar_lea.sflag [#allocation3], 1
    %10 = vsyncpa %s9, 0
    loop: start=0, step=1, limit=6
    $region2: #{tpu_custom_call.1} parent=1 // loop_pre_header
      _
    $region3: #{tpu_custom_call.1} parent=1 // loop_header
      %s12 = sphi 0, %s16
      %p13 = scmp.ge.s32.totalorder %s12, 6
      %s19 = sphi 0, %s31
      %s20 = sphi 0, %s27
      %s21 = sphi 0, %s19
      %s22 = sphi 0, %s20
      %s23 = sphi 0, %s21
      %s24 = sphi 0, %s22
      %s32 = sphi 0, %s32
      %s34 = sphi 0, %s32
      %s35 = sphi 0, %s34
      %s49 = sphi 0, %s35
      %s53 = sphi 0, %s53
      %s55 = sphi 0, %s53
      %s56 = sphi 0, %s55
      %s70 = sphi 0, %s56
      %s78 = sphi 0, %s80
      %s81 = sphi 0, %s78
      %s82 = sphi 0, %s81
      %s98 = sphi 0, %s82
      %s106 = sphi 0, %s108
      %s109 = sphi 0, %s106
      %s110 = sphi 0, %s109
      %s126 = sphi 0, %s110
    $region4: #{tpu_custom_call.1} parent=1 // loop_header_branch
      %15 = sbr.rel (%p13) target = $region8
    $region5: #{tpu_custom_call.1} parent=1 // loop_body
      %s17 = ssub.s32 %s12, 1
      %s18 = ssub.s32 %s12, 2
      %s25 = sadd.s32 1, %s20
      %p26 = scmp.ge.s32.totalorder %s25, 2
      %s27 = scalar_select %p26, 0, %s25
      %s28 = sadd.s32 1, %s19
      %s29 = scalar_select %p26, %s28, %s19
      %p30 = scmp.ge.s32.totalorder %s29, 2
      %s31 = scalar_select %p30, 0, %s29
      %s33 = sadd.s32 %s32, 1
      %p36 = scmp.eq.s32.totalorder %s12, 3
      %p37 = scmp.ne.s32.totalorder %s32, %s34
      %p38 = scmp.eq.s32.totalorder %s12, 0
      %p39 = por %p37, %p38
      %p40 = scmp.ne.s32.totalorder %s32, %s34
      %p41 = scmp.eq.s32.totalorder %s17, 3
      %p42 = por %p40, %p41
      %p43 = scmp.ne.s32.totalorder %s34, %s35
      %p44 = scmp.eq.s32.totalorder %s17, 0
      %p45 = por %p43, %p44
      %p46 = scmp.ne.s32.totalorder %s34, %s35
      %p47 = scmp.eq.s32.totalorder %s18, 3
      %p48 = por %p46, %p47
      %p50 = scmp.ne.s32.totalorder %s35, %s49
      %p51 = scmp.eq.s32.totalorder %s18, 0
      %p52 = por %p50, %p51
      %s54 = sadd.s32 %s53, 1
      %p57 = scmp.eq.s32.totalorder %s12, 3
      %p58 = scmp.ne.s32.totalorder %s53, %s55
      %p59 = scmp.eq.s32.totalorder %s12, 0
      %p60 = por %p58, %p59
      %p61 = scmp.ne.s32.totalorder %s53, %s55
      %p62 = scmp.eq.s32.totalorder %s17, 3
      %p63 = por %p61, %p62
      %p64 = scmp.ne.s32.totalorder %s55, %s56
      %p65 = scmp.eq.s32.totalorder %s17, 0
      %p66 = por %p64, %p65
      %p67 = scmp.ne.s32.totalorder %s55, %s56
      %p68 = scmp.eq.s32.totalorder %s18, 3
      %p69 = por %p67, %p68
      %p71 = scmp.ne.s32.totalorder %s56, %s70
      %p72 = scmp.eq.s32.totalorder %s18, 0
      %p73 = por %p71, %p72
      %s74 = ssub.s32 %s19, %s31
      %s75 = ssub.s32 %s20, %s27
      %s76 = sor.u32 %s74, %s75
      %p77 = scmp.eq.s32.totalorder %s76, 0
      %s79 = sadd.s32 %s78, 1
      %s80 = scalar_select %p77, %s78, %s79
      %p83 = pneg %p77
      %p84 = scmp.eq.s32.totalorder %s12, 3
      %p85 = por %p83, %p84
      %p86 = scmp.ne.s32.totalorder %s78, %s81
      %p87 = scmp.eq.s32.totalorder %s12, 0
      %p88 = por %p86, %p87
      %p89 = scmp.ne.s32.totalorder %s78, %s81
      %p90 = scmp.eq.s32.totalorder %s17, 3
      %p91 = por %p89, %p90
      %p92 = scmp.ne.s32.totalorder %s81, %s82
      %p93 = scmp.eq.s32.totalorder %s17, 0
      %p94 = por %p92, %p93
      %p95 = scmp.ne.s32.totalorder %s81, %s82
      %p96 = scmp.eq.s32.totalorder %s18, 3
      %p97 = por %p95, %p96
      %p99 = scmp.ne.s32.totalorder %s82, %s98
      %p100 = scmp.eq.s32.totalorder %s18, 0
      %p101 = por %p99, %p100
      %s102 = ssub.s32 %s19, %s31
      %s103 = ssub.s32 %s20, %s27
      %s104 = sor.u32 %s102, %s103
      %p105 = scmp.eq.s32.totalorder %s104, 0
      %s107 = sadd.s32 %s106, 1
      %s108 = scalar_select %p105, %s106, %s107
      %p111 = pneg %p105
      %p112 = scmp.eq.s32.totalorder %s12, 3
      %p113 = por %p111, %p112
      %p114 = scmp.ne.s32.totalorder %s106, %s109
      %p115 = scmp.eq.s32.totalorder %s12, 0
      %p116 = por %p114, %p115
      %p117 = scmp.ne.s32.totalorder %s106, %s109
      %p118 = scmp.eq.s32.totalorder %s17, 3
      %p119 = por %p117, %p118
      %p120 = scmp.ne.s32.totalorder %s109, %s110
      %p121 = scmp.eq.s32.totalorder %s17, 0
      %p122 = por %p120, %p121
      %p123 = scmp.ne.s32.totalorder %s109, %s110
      %p124 = scmp.eq.s32.totalorder %s18, 3
      %p125 = por %p123, %p124
      %p127 = scmp.ne.s32.totalorder %s110, %s126
      %p128 = scmp.eq.s32.totalorder %s18, 0
      %p129 = por %p127, %p128
      %p130 = scmp.le.s32.totalorder 1, %s12
      %p131 = scmp.lt.s32.totalorder %s12, 5
      %p132 = pnand %p130, %p131
      %p133 = pneg %p132
      // Predicated region
      $region9: #{tpu_custom_call.1} parent=5 // pred_check
        _
      $region10: #{tpu_custom_call.1} parent=5 // pred_check_branch
        %135 = sbr.rel (%p132) target = $region12
      $region11: #{tpu_custom_call.1} parent=5 // pred_region
        %s136 = ssub.s32 %s12, 1
        // Predicated region
        $region13: #{tpu_custom_call.1} parent=11 // pred_check
          %p137 = pneg %p45
        $region14: #{tpu_custom_call.1} parent=11 // pred_check_branch
          %139 = sbr.rel (%p137) target = $region16
        $region15: #{tpu_custom_call.1} parent=11 // pred_region
          _
        $region16: #{tpu_custom_call.1} parent=11 // pred_fallthru
          _
        // Predicated region
        $region17: #{tpu_custom_call.1} parent=11 // pred_check
          %p140 = pneg %p66
        $region18: #{tpu_custom_call.1} parent=11 // pred_check_branch
          %142 = sbr.rel (%p140) target = $region20
        $region19: #{tpu_custom_call.1} parent=11 // pred_region
          _
        $region20: #{tpu_custom_call.1} parent=11 // pred_fallthru
          _
      $region12: #{tpu_custom_call.1} parent=5 // pred_fallthru
        _
      %p143 = scmp.lt.s32.totalorder %s12, 4
      // Predicated region
      $region21: #{tpu_custom_call.1} parent=5 // pred_check
        %p144 = pneg %p143
      $region22: #{tpu_custom_call.1} parent=5 // pred_check_branch
        %146 = sbr.rel (%p144) target = $region24
      $region23: #{tpu_custom_call.1} parent=5 // pred_region
        // Predicated region
        $region25: #{tpu_custom_call.1} parent=23 // pred_check
          %p147 = pneg %p88
        $region26: #{tpu_custom_call.1} parent=23 // pred_check_branch
          %149 = sbr.rel (%p147) target = $region28
        $region27: #{tpu_custom_call.1} parent=23 // pred_region
          %p150 = scmp.lt.s32.totalorder %s19, 1
          %s151 = scalar_select %p150, %s19, 1
          %p152 = scmp.lt.s32.totalorder %s20, 1
          %s153 = scalar_select %p152, %s20, 1
          %s154 = smul.addr %s153, 2
          %s155 = smul.addr %s151, 4
          %s156 = sadd.s32 %s154, %s155
          %s157 = smul.addr %s156, 2
          %s158 = scalar_lea.vmem %s2, %s157
        $region28: #{tpu_custom_call.1} parent=23 // pred_fallthru
          _
      $region24: #{tpu_custom_call.1} parent=5 // pred_fallthru
        _
      %p159 = scmp.le.s32.totalorder 1, %s12
      %p160 = scmp.lt.s32.totalorder %s12, 5
      %p161 = pnand %p159, %p160
      %p162 = pneg %p161
      // Predicated region
      $region29: #{tpu_custom_call.1} parent=5 // pred_check
        _
      $region30: #{tpu_custom_call.1} parent=5 // pred_check_branch
        %164 = sbr.rel (%p161) target = $region32
      $region31: #{tpu_custom_call.1} parent=5 // pred_region
        %s165 = ssub.s32 %s12, 1
        %p166 = pneg %p45
        %p167 = pneg %p42
        %p168 = pneg %p66
        %p169 = pneg %p63
        %p170 = scmp.lt.s32.totalorder %s21, 1
        %s171 = scalar_select %p170, %s21, 1
        %p172 = scmp.lt.s32.totalorder %s22, 1
        %s173 = scalar_select %p172, %s22, 1
        %s174 = smul.addr %s173, 2
        %s175 = smul.addr %s171, 4
        %s176 = sadd.s32 %s174, %s175
        %s177 = smul.addr %s176, 2
        %s178 = scalar_lea.vmem %s2, %s177
        %p179 = pneg %p94
        %p180 = pneg %p91
        %p181 = pneg %p122
        %p182 = pneg %p119
        %s183 = sand.u32 %s109, 1
        %s184 = scalar_lea.sflag [#allocation3], %s183
        %s185 = sand.u32 %s109, 1
        %s186 = smul.addr %s185, 64
        %s187 = scalar_lea.vmem [#allocation2], %s186
        %p188 = scmp.lt.s32.totalorder %s21, 1
        %s189 = scalar_select %p188, %s21, 1
        %p190 = scmp.lt.s32.totalorder %s22, 1
        %s191 = scalar_select %p190, %s22, 1
        %s192 = smul.addr %s191, 2
        %s193 = smul.addr %s189, 4
        %s194 = sadd.s32 %s192, %s193
        %s195 = smul.addr %s194, 2
        %s196 = scalar_lea.vmem %s2, %s195
        %v198 = vld [vmem:[%s196] sm:$0xf]
        %v201 = vunpack.c.l.s4 1983009808
        %v202 = vunpack.c.0.s8 %v201
        %v203 = vlaneseq
        %v204 = vshrl.u32 %v203, 7
        %v205 = vsub.s32 %v202, %v204
        %v206 = vrot.slane %v198, %v205
        %v207 = vcombine.high %v206, %v206
        %v208 = vcombine.low %v198, %v198
        %v210 = vunpack.c.l.s4 1983009808
        %v211 = vunpack.c.0.s8 %v210
        %v212 = vlaneseq
        %v213 = vshrl.u32 %v212, 7
        %v214 = vsub.s32 %v211, %v213
        %v215 = vrot.slane %v208, %v214
        %v216 = vcombine.high %v215, %v215
        %217 = vrot.lane.b32.xlu0 %v215, 127
        %v218 = vpop.permute.xlu0 %217
        %219 = vrot.lane.b32.xlu0 %v216, 127
        %v220 = vpop.permute.xlu0 %219
        %vm221 = vcmask 1039360
        %v222 = vsel %vm221, %v218, %v220
        %v223 = vcombine.low %v206, %v206
        %224 = vrot.lane.b32.xlu0 %v223, 126
        %v225 = vpop.permute.xlu0 %224
        %226 = vrot.lane.b32.xlu0 %v206, 126
        %v227 = vpop.permute.xlu0 %226
        %vm228 = vcmask 1031168
        %v229 = vsel %vm228, %v225, %v227
        %v230 = vcombine.low %v215, %v215
        %231 = vrot.lane.b32.xlu0 %v230, 110
        %v232 = vpop.permute.xlu0 %231
        %233 = vrot.lane.b32.xlu0 %v215, 110
        %v234 = vpop.permute.xlu0 %233
        %vm235 = vcmask 900096
        %v236 = vsel %vm235, %v232, %v234
        %237 = vrot.lane.b32.xlu0 %v206, 109
        %v238 = vpop.permute.xlu0 %237
        %239 = vrot.lane.b32.xlu0 %v207, 109
        %v240 = vpop.permute.xlu0 %239
        %vm241 = vcmask 891904
        %v242 = vsel %vm241, %v238, %v240
        %243 = vrot.lane.b32.xlu0 %v215, 108
        %v244 = vpop.permute.xlu0 %243
        %245 = vrot.lane.b32.xlu0 %v216, 108
        %v246 = vpop.permute.xlu0 %245
        %vm247 = vcmask 883712
        %v248 = vsel %vm247, %v244, %v246
        %249 = vrot.lane.b32.xlu0 %v223, 92
        %v250 = vpop.permute.xlu0 %249
        %251 = vrot.lane.b32.xlu0 %v206, 92
        %v252 = vpop.permute.xlu0 %251
        %vm253 = vcmask 752640
        %v254 = vsel %vm253, %v250, %v252
        %255 = vrot.lane.b32.xlu0 %v230, 91
        %v256 = vpop.permute.xlu0 %255
        %257 = vrot.lane.b32.xlu0 %v215, 91
        %v258 = vpop.permute.xlu0 %257
        %vm259 = vcmask 744448
        %v260 = vsel %vm259, %v256, %v258
        %261 = vrot.lane.b32.xlu0 %v206, 90
        %v262 = vpop.permute.xlu0 %261
        %263 = vrot.lane.b32.xlu0 %v207, 90
        %v264 = vpop.permute.xlu0 %263
        %vm265 = vcmask 736256
        %v266 = vsel %vm265, %v262, %v264
        %vm267 = vcmask 1041408
        %v270 = vsel %vm267, %v206, %v222
        %v273 = vsel %vm267, %v207, %v220
        %vm274 = vcmask 1043456
        %v276 = vsel %vm274, %v270, %v229
        %v278 = vsel %vm274, %v273, %v227
        %vm279 = vcmask 1045504
        %v281 = vsel %vm279, %v276, %v236
        %v284 = vsel %vm279, %v278, %v234
        %v288 = vsel %vm267, %v242, %v248
        %v291 = vsel %vm267, %v240, %v246
        %v293 = vsel %vm274, %v288, %v254
        %v295 = vsel %vm274, %v291, %v252
        %v297 = vsel %vm279, %v293, %v260
        %v300 = vsel %vm279, %v295, %v258
        %v302 = vld [vmem:[%s0] sm:$0xf]
        %v303 = vld [vmem:[%s0 + $0x4] sm:$0xf]
        %v304 = vld [vmem:[%s0 + $0x8] sm:$0xf]
        %v305 = vld [vmem:[%s0 + $0xc] sm:$0xf]
        %v306 = vld [vmem:[%s1] sm:$0xff]
        %v307 = vld [vmem:[%s1 + $0x8] sm:$0xff]
        %v308 = vld [vmem:[%s1 + $0x10] sm:$0xff]
        %v309 = vld [vmem:[%s1 + $0x18] sm:$0xff]
        %311 = vset.pattern.permute.xlu0 0
        %312 = vperm.xlu0 %311, %v306
        %v313 = vpop.permute.xlu0 %312
        %316 = vset.pattern.permute.xlu0 0
        %317 = vperm.xlu0 %316, %v307
        %v318 = vpop.permute.xlu0 %317
        %321 = vset.pattern.permute.xlu0 0
        %322 = vperm.xlu0 %321, %v308
        %v323 = vpop.permute.xlu0 %322
        %326 = vset.pattern.permute.xlu0 0
        %327 = vperm.xlu0 %326, %v309
        %v328 = vpop.permute.xlu0 %327
        %v334 = vunpack.c.l.b16 %v302
        %v335 = vunpack.c.l.b16 %v303
        %v336 = vunpack.c.l.b16 %v304
        %v337 = vunpack.c.l.b16 %v305
        %v338 = vpack.c.b16 %v335, %v334
        %v339 = vpack.c.b16 %v337, %v336
        %vm340 = vcmask 293888
        %v342 = vsel %vm340, %v338, 0
        %v345 = vsel %vm340, %v339, 0
        %v348 = vsel %vm267, %v266, 0
        %v351 = vsel %vm267, %v264, 0
        %353 = vmatprep.subr.bf16.mxu0 %v284
        %354 = vmatpush1.bf16.msra.mxu0 %v281
        %355 = vmatprep.subr.bf16.mxu0 %v300
        %356 = vmatpush1.bf16.msra.mxu0 %v297
        %357 = vmatprep.subr.bf16.mxu0 %v351
        %358 = vmatpush1.bf16.msra.mxu0 %v348
        %359 = vmatprep.subr.bf16.mxu0 0
        %360 = vmatpush1.bf16.msra.mxu0 0
        %361 = vmatprep.subr.bf16.mxu0 0
        %362 = vmatpush1.bf16.msra.mxu0 0
        %363 = vmatprep.subr.bf16.mxu0 0
        %364 = vmatpush1.bf16.msra.mxu0 0
        %365 = vmatprep.subr.bf16.mxu0 0
        %366 = vmatpush1.bf16.msra.mxu0 0
        %367 = vmatprep.subr.bf16.mxu0 0
        %368 = vmatpush1.bf16.msra.mxu0 0
        %369 = vmatprep.subr.bf16.mxu0 0
        %370 = vmatpush1.bf16.msra.mxu0 0
        %371 = vmatprep.subr.bf16.mxu0 0
        %372 = vmatpush1.bf16.msra.mxu0 0
        %373 = vmatprep.subr.bf16.mxu0 0
        %374 = vmatpush1.bf16.msra.mxu0 0
        %375 = vmatprep.subr.bf16.mxu0 0
        %376 = vmatpush1.bf16.msra.mxu0 0
        %377 = vmatprep.subr.bf16.mxu0 0
        %378 = vmatpush1.bf16.msra.mxu0 0
        %379 = vmatprep.subr.bf16.mxu0 0
        %380 = vmatpush1.bf16.msra.mxu0 0
        %381 = vmatprep.subr.bf16.mxu0 0
        %382 = vmatpush1.bf16.msra.mxu0 0
        %383 = vmatprep.subr.bf16.mxu0 0
        %384 = vmatpush1.bf16.msra.mxu0 0
        %385 = vmatprep.mubr.bf16.mxu0 0
        %386 = vmatmul.mubr.bf16.gmra.mrb[0].mxu0 %v342
        %v387 = vpop.f32.mrb[0].mxu0
        %v388 = vadd.f32 %v313, %v387
        %v389 = vpop.f32.mrb[0].mxu0
        %v390 = vadd.f32 %v313, %v389
        %v391 = vpop.f32.mrb[0].mxu0
        %v392 = vadd.f32 %v318, %v391
        %v393 = vpop.f32.mrb[0].mxu0
        %v394 = vadd.f32 %v318, %v393
        %395 = vmatprep.mubr.bf16.mxu0 0
        %396 = vmatmul.mubr.bf16.gmra.mrb[0].mxu0 %v345
        %v397 = vpop.f32.mrb[0].mxu0
        %v398 = vadd.f32 %v323, %v397
        %v399 = vpop.f32.mrb[0].mxu0
        %v400 = vadd.f32 %v323, %v399
        %v401 = vpop.f32.mrb[0].mxu0
        %v402 = vadd.f32 %v328, %v401
        %v403 = vpop.f32.mrb[0].mxu0
        %v404 = vadd.f32 %v328, %v403
        %405 = vdwg.mxu0
        %v406 = vxor.u32 %v388, 2147483648
        %v407 = vxor.u32 %v390, 2147483648
        %v408 = vxor.u32 %v392, 2147483648
        %v409 = vxor.u32 %v394, 2147483648
        %v410 = vxor.u32 %v398, 2147483648
        %v411 = vxor.u32 %v400, 2147483648
        %v412 = vxor.u32 %v402, 2147483648
        %v413 = vxor.u32 %v404, 2147483648
        %v414 = vmul.f32 %v406, 1.442695
        %v415 = vpow.pop %v414
        %v416 = vmul.f32 %v407, 1.442695
        %v417 = vpow.pop %v416
        %v418 = vmul.f32 %v408, 1.442695
        %v419 = vpow.pop %v418
        %v420 = vmul.f32 %v409, 1.442695
        %v421 = vpow.pop %v420
        %v422 = vmul.f32 %v410, 1.442695
        %v423 = vpow.pop %v422
        %v424 = vmul.f32 %v411, 1.442695
        %v425 = vpow.pop %v424
        %v426 = vmul.f32 %v412, 1.442695
        %v427 = vpow.pop %v426
        %v428 = vmul.f32 %v413, 1.442695
        %v429 = vpow.pop %v428
        %v430 = vadd.f32 %v415, 1.0
        %v431 = vadd.f32 %v417, 1.0
        %v432 = vadd.f32 %v419, 1.0
        %v433 = vadd.f32 %v421, 1.0
        %v434 = vadd.f32 %v423, 1.0
        %v435 = vadd.f32 %v425, 1.0
        %v436 = vadd.f32 %v427, 1.0
        %v437 = vadd.f32 %v429, 1.0
        %v438 = vrcp.pop %v430
        %v439 = vmul.f32 1.0, %v438
        %v440 = vrcp.pop %v431
        %v441 = vmul.f32 1.0, %v440
        %v442 = vrcp.pop %v432
        %v443 = vmul.f32 1.0, %v442
        %v444 = vrcp.pop %v433
        %v445 = vmul.f32 1.0, %v444
        %v446 = vrcp.pop %v434
        %v447 = vmul.f32 1.0, %v446
        %v448 = vrcp.pop %v435
        %v449 = vmul.f32 1.0, %v448
        %v450 = vrcp.pop %v436
        %v451 = vmul.f32 1.0, %v450
        %v452 = vrcp.pop %v437
        %v453 = vmul.f32 1.0, %v452
        %v454 = vmul.f32 %v388, %v439
        %v455 = vmul.f32 %v390, %v441
        %v456 = vmul.f32 %v392, %v443
        %v457 = vmul.f32 %v394, %v445
        %v458 = vmul.f32 %v398, %v447
        %v459 = vmul.f32 %v400, %v449
        %v460 = vmul.f32 %v402, %v451
        %v461 = vmul.f32 %v404, %v453
        %462 = vst [vmem:[%s187] sm:$0xff] %v454
        %vm463 = vcmask 130048
        %464 = vst.msk [vmem:[%s187 + $0x8] sm:$0xff] %vm463, %v455
        %465 = vst [vmem:[%s187 + $0x10] sm:$0xff] %v456
        %466 = vst.msk [vmem:[%s187 + $0x18] sm:$0xff] %vm463, %v457
        %467 = vst [vmem:[%s187 + $0x20] sm:$0xff] %v458
        %468 = vst.msk [vmem:[%s187 + $0x28] sm:$0xff] %vm463, %v459
        %469 = vst [vmem:[%s187 + $0x30] sm:$0xff] %v460
        %470 = vst.msk [vmem:[%s187 + $0x38] sm:$0xff] %vm463, %v461
        %s471 = sand.u32 %s109, 1
        %s472 = scalar_lea.sflag [#allocation3], %s471
        %s473 = sand.u32 %s109, 1
        %s474 = smul.addr %s473, 64
        %s475 = scalar_lea.vmem [#allocation2], %s474
        // Predicated region
        $region33: #{tpu_custom_call.1} parent=31 // pred_check
          %p476 = pneg %p119
        $region34: #{tpu_custom_call.1} parent=31 // pred_check_branch
          %478 = sbr.rel (%p476) target = $region36
        $region35: #{tpu_custom_call.1} parent=31 // pred_region
          %s480 = ssub.s32 1024, 1024
          %481 = vsyncadd %s472, %s480
          %s482 = smul.addr %s22, 8
          %s483 = smul.addr %s21, 16
          %s484 = sadd.s32 %s482, %s483
          %s485 = smul.addr %s484, 128
          %s486 = scalar_lea.hbm %s3, %s485
          %s487 = sshll.u32 %s475, 4
          %s488 = int_to_ptr.vmem [resolvable:$true] %s487
          %493 = dma.vmem_to_hbm [thread:$0]  %s488, 1024, %s486, %s472, 256, 256, 16
        $region36: #{tpu_custom_call.1} parent=31 // pred_fallthru
          _
      $region32: #{tpu_custom_call.1} parent=5 // pred_fallthru
        _
      %p494 = scmp.le.s32.totalorder 2, %s12
      // Predicated region
      $region37: #{tpu_custom_call.1} parent=5 // pred_check
        %p495 = pneg %p494
      $region38: #{tpu_custom_call.1} parent=5 // pred_check_branch
        %497 = sbr.rel (%p495) target = $region40
      $region39: #{tpu_custom_call.1} parent=5 // pred_region
        %s498 = ssub.s32 %s12, 2
        // Predicated region
        $region41: #{tpu_custom_call.1} parent=39 // pred_check
          %p499 = pneg %p125
        $region42: #{tpu_custom_call.1} parent=39 // pred_check_branch
          %501 = sbr.rel (%p499) target = $region44
        $region43: #{tpu_custom_call.1} parent=39 // pred_region
          %s502 = sand.u32 %s110, 1
          %s503 = scalar_lea.sflag [#allocation3], %s502
          %s504 = sand.u32 %s110, 1
          %s505 = smul.addr %s504, 64
          %s506 = scalar_lea.vmem [#allocation2], %s505
          %507 = dma.done %s503, 1024
        $region44: #{tpu_custom_call.1} parent=39 // pred_fallthru
          _
      $region40: #{tpu_custom_call.1} parent=5 // pred_fallthru
        _
    $region6: #{tpu_custom_call.1} parent=1 // loop_footer
      %s16 = sadd.s32 1, %s12
    $region7: #{tpu_custom_call.1} parent=1 // loop_footer_branch
      %11 = sbr.rel target = $region3
    $region8: #{tpu_custom_call.1} parent=1 // loop_exit
      _
    %508 = vsyncpa [#allocation3], 1
    %s509 = scalar_lea.sflag [#allocation3], 1
    %510 = vsyncpa %s509, 1

</llo_original>
